<compile_context>
chip_gen: v5e
topology: v5e:2x2
jax: 0.10.0
libtpu: 0.0.40
codegen_flags: <defaults>
</compile_context>

<pallas_src>
import functools

import jax
import jax.numpy as jnp
from jax.experimental import pallas as pl
from jax.experimental.pallas import tpu as pltpu

# ---------------- problem sizes (small, aligned) ----------------
T = 8        # tokens
K = 128      # in_features
N = 512      # out_features (column-parallel dim)
D = 4        # max_deltas (only deltas {0, 2} are used by the batch below)
PACK = 8     # pack_factor (4-bit nibbles in int32)
KP = K // PACK
TN = 256     # output-column tile: MXU lane width on v6e/v7x, and keeps >=2 N tiles for v7x's 2 TCs


# ---------------- Pallas kernel ----------------
def _delta_linear_kernel(active_ref, fetch_ref,        # scalar-prefetch tables (SMEM)
                         x_ref, w_ref, qw_ref, sc_ref, idx_ref,
                         out_ref, *, pack_factor):
    d = pl.program_id(1)                               # delta index (last / "arbitrary" axis)
    tn = out_ref.shape[1]

    # Cast x to bf16 once; reused by the base and delta matmuls (and the zero-point term).
    xb = x_ref[...].astype(jnp.bfloat16)               # [T, K]

    # ---- base matmul: initialize the resident output block once per N-tile ----
    @pl.when(d == 0)
    def _base():
        out_ref[...] = jax.lax.dot_general(            # x @ W^T, W prepared as bf16 [K, TN]
            xb, w_ref[...], (((1,), (0,)), ((), ())),
            preferred_element_type=jnp.float32)

    # ---- delta correction: only if some token in the batch uses delta d ----
    @pl.when(active_ref[d] != 0)
    def _delta():
        mask = idx_ref[...] == d                       # [T, 1]
        xd_b = jnp.where(mask, xb, jnp.zeros_like(xb)) # zero tokens not using delta d  [T, K] bf16

        q = qw_ref[0]                                  # [KP, TN] int32 (packed 4-bit), delta d

        # Assemble the full-depth [K, TN] bf16 weight tile (64 KiB @ TN=256) and do ONE
        # K-deep MXU contraction. Scale and zero-point (8) are folded past the matmul:
        #   (xd @ (w_int - 8)) * scale == (xd @ w_int - 8 * sum(xd)) * scale
        parts = [((q >> (4 * p)) & 0xF).astype(jnp.bfloat16)   # nibble p -> rows [p*KP,(p+1)*KP)
                 for p in range(pack_factor)]
        w_int = jnp.concatenate(parts, axis=0)         # [K, TN] bf16 (exact: nibbles fit bf16)

        dacc = jax.lax.dot_general(
            xd_b, w_int, (((1,), (0,)), ((), ())),
            preferred_element_type=jnp.float32)        # [T, TN] f32

        # zero-point correction from the SAME bf16 operand used in the matmul (exact fold)
        xsum = jnp.sum(xd_b.astype(jnp.float32), axis=1, keepdims=True)   # [T, 1]

        scale = sc_ref[d]                              # [1, TN] f32 (resident per N-tile block)
        out_ref[...] += (dacc - 8.0 * xsum) * scale


# ---------------- one-time / per-batch preparation (hoisted out of the forward) ----------------
def prepare_base_weight(base_weight):
    """Weight-load-time prep: [N, K] f32 -> [K, N] bf16 (done once, NOT per forward call)."""
    return jnp.asarray(base_weight.T, dtype=jnp.bfloat16)


def compute_delta_tables(indices, max_deltas):
    """Per-batch prep (depends only on `indices`; shared by every delta layer in the model).

    active[d] = 1 iff some token in this batch uses delta d.
    fetch[d]  = d if active, else the last active delta <= d, so consecutive grid steps request
                the same qweight block and the pipeline dedupes the HBM->VMEM DMA.
    """
    idx_flat = indices.reshape(-1)
    dr = jnp.arange(max_deltas)
    active = jnp.any(idx_flat[:, None] == dr[None, :], axis=0).astype(jnp.int32)
    marked = jnp.where(active > 0, dr, -1)
    fetch = jnp.maximum(jax.lax.cummax(marked, axis=0), 0).astype(jnp.int32)
    return active, fetch


# ---------------- forward (pallas_call only; no per-call prep work) ----------------
def delta_column_parallel_linear(x, w_t, qweight_stacked, scales_stacked,
                                 indices, active, fetch, *, tn=TN):
    """Equivalent of ColumnParallelLinearWithDelta.forward (tp_size == 1).

    `w_t` comes from prepare_base_weight(); `active`/`fetch` from compute_delta_tables().
    Returns (output, output_bias) just like the PyTorch module.
    """
    t, k = x.shape
    k2, n = w_t.shape
    d, kp, n2 = qweight_stacked.shape
    pack_factor = k // kp
    assert k2 == k and n2 == n and kp * pack_factor == k
    tn = min(tn, n)
    assert n % tn == 0

    kernel = functools.partial(_delta_linear_kernel, pack_factor=pack_factor)

    out = pl.pallas_call(
        kernel,
        out_shape=jax.ShapeDtypeStruct((t, n), jnp.float32),
        grid_spec=pltpu.PrefetchScalarGridSpec(
            num_scalar_prefetch=2,                     # active, fetch -> SMEM + index_maps
            grid=(n // tn, d),                         # (N tiles, deltas); delta axis last
            in_specs=[
                pl.BlockSpec((t, k),       lambda j, di, act, ft: (0, 0)),        # x (resident)
                pl.BlockSpec((k, tn),      lambda j, di, act, ft: (0, j)),        # base W^T tile
                pl.BlockSpec((1, kp, tn),  lambda j, di, act, ft: (ft[di], 0, j)),# packed delta
                pl.BlockSpec((d, 1, tn),   lambda j, di, act, ft: (0, 0, j)),     # all-delta scales
                pl.BlockSpec((t, 1),       lambda j, di, act, ft: (0, 0)),        # token->delta map
            ],
            out_specs=pl.BlockSpec((t, tn), lambda j, di, act, ft: (0, j)),       # resident acc
        ),
        compiler_params=pltpu.CompilerParams(
            dimension_semantics=("parallel", "arbitrary"),
            vmem_limit_bytes=32 * 1024 * 1024,         # fits v7x's 64 MiB physical with headroom
        ),
    )(active, fetch, x, w_t, qweight_stacked, scales_stacked, indices)

    output_bias = None  # skip_bias_add == False path; apply_delta never adds bias
    return out, output_bias


# ---------------- reference (pure JAX) ----------------
def _dequant_ref(q, sc, pack_factor):
    parts = [((q >> (4 * p)) & 0xF) for p in range(pack_factor)]
    w_int = jnp.concatenate(parts, axis=0)             # [K, N]
    return (w_int.astype(jnp.float32) - 8.0) * sc


def reference(x, base_weight, qweight_stacked, scales_stacked, indices):
    pack_factor = x.shape[1] // qweight_stacked.shape[1]
    out = x @ base_weight.T
    idx = indices[:, 0]
    for i in range(x.shape[0]):
        di = int(idx[i])
        if di >= 0:
            wd = _dequant_ref(qweight_stacked[di], scales_stacked[di], pack_factor)
            out = out.at[i].add(x[i] @ wd)
    return out


# ---------------- main ----------------
if __name__ == "__main__":
    key = jax.random.PRNGKey(0)
    k_x, k_w, k_q, k_s = jax.random.split(key, 4)

    x = jax.random.normal(k_x, (T, K), dtype=jnp.float32) * 0.5
    base_weight = jax.random.normal(k_w, (N, K), dtype=jnp.float32) * 0.05

    # synthetic quantized deltas: random 4-bit nibbles, packed p-major into int32
    nibbles = jax.random.randint(k_q, (D, PACK, KP, N), 0, 16, dtype=jnp.int32)
    nib_u32 = nibbles.astype(jnp.uint32)
    packed_u32 = jnp.zeros((D, KP, N), dtype=jnp.uint32)
    for p in range(PACK):
        packed_u32 = packed_u32 | (nib_u32[:, p] << jnp.uint32(4 * p))
    qweight_stacked = jax.lax.bitcast_convert_type(packed_u32, jnp.int32)  # [D, KP, N]

    scales_stacked = (jax.random.uniform(k_s, (D, 1, N), dtype=jnp.float32) * 0.02 + 0.001)

    # per-token delta mapping: deltas 0 and 2 used, deltas 1 and 3 inactive, some tokens none (-1)
    indices = jnp.array([0, 2, -1, 0, 2, -1, 0, 2], dtype=jnp.int32).reshape(T, 1)

    # --- one-time weight prep (load time) and once-per-batch control tables ---
    w_t = jax.block_until_ready(prepare_base_weight(base_weight))          # [K, N] bf16, cached
    active, fetch = compute_delta_tables(indices, D)                       # shared across layers

    out, out_bias = delta_column_parallel_linear(
        x, w_t, qweight_stacked, scales_stacked, indices, active, fetch)
    out = jax.block_until_ready(out)

    ref = reference(x, base_weight, qweight_stacked, scales_stacked, indices)

    assert out.shape == (T, N)
    assert out_bias is None
    # bf16 weight-side operands (f32 accumulation) -> bf16-level parity with the f32 reference.
    assert jnp.allclose(out, ref, rtol=2e-2, atol=2e-2), (
        f"max abs err {float(jnp.max(jnp.abs(out - ref)))}")

    print("KERNEL_OK")
</pallas_src>

<mosaic_0001>
module attributes {stable_mosaic.version = 11 : i64} {
  func.func @_delta_linear_kernel(%arg0: i32, %arg1: i32, %arg2: memref<4xi32, #tpu.memory_space<smem>>, %arg3: memref<4xi32, #tpu.memory_space<smem>>, %arg4: memref<8x128xf32, #tpu.memory_space<vmem>>, %arg5: memref<128x256xbf16, #tpu.memory_space<vmem>>, %arg6: memref<1x16x256xi32, #tpu.memory_space<vmem>>, %arg7: memref<4x1x256xf32, #tpu.memory_space<vmem>>, %arg8: memref<8x1xi32, #tpu.memory_space<vmem>>, %arg9: memref<8x256xf32, #tpu.memory_space<vmem>>) attributes {dimension_semantics = [#tpu.dimension_semantics<parallel>, #tpu.dimension_semantics<arbitrary>], iteration_bounds = array<i64: 2, 4>, scalar_prefetch = 2 : i64, scratch_operands = 0 : i64, tpu.core_type = #tpu.core_type<tc>, window_params = [{pipeline_mode = #tpu.pipeline_mode<synchronous>, transform_indices = @transform_0, window_bounds = array<i64: 8, 128>}, {transform_indices = @transform_1, window_bounds = array<i64: 128, 256>}, {transform_indices = @transform_2, window_bounds = array<i64: 1, 16, 256>}, {transform_indices = @transform_3, window_bounds = array<i64: 4, 1, 256>}, {pipeline_mode = #tpu.pipeline_mode<synchronous>, transform_indices = @transform_4, window_bounds = array<i64: 8, 1>}, {transform_indices = @transform_5, window_bounds = array<i64: 8, 256>}]} {
    %c0 = arith.constant 0 : index
    %c0_0 = arith.constant 0 : index
    %0 = vector.load %arg4[%c0, %c0_0] : memref<8x128xf32, #tpu.memory_space<vmem>>, vector<8x128xf32>
    %1 = arith.truncf %0 : vector<8x128xf32> to vector<8x128xbf16>
    %c0_i32 = arith.constant 0 : i32
    %2 = arith.cmpi eq, %arg1, %c0_i32 : i32
    %3 = arith.extui %2 : i1 to i32
    %c0_i32_1 = arith.constant 0 : i32
    %4 = arith.cmpi ne, %3, %c0_i32_1 : i32
    scf.if %4 {
      %c0_4 = arith.constant 0 : index
      %c0_5 = arith.constant 0 : index
      %10 = vector.load %arg5[%c0_4, %c0_5] : memref<128x256xbf16, #tpu.memory_space<vmem>>, vector<128x256xbf16>
      %cst = arith.constant dense<0.000000e+00> : vector<8x256xf32>
      %11 = tpu.matmul %1, %10, %cst {dimension_numbers = #tpu.dot_dimension_numbers<[1], [0], [0], [1], [0, 0, 1, 1], [], []>} : vector<8x128xbf16>, vector<128x256xbf16>, vector<8x256xf32> -> vector<8x256xf32>
      %c0_6 = arith.constant 0 : index
      %c0_7 = arith.constant 0 : index
      %12 = vector.load %arg9[%c0_6, %c0_7] : memref<8x256xf32, #tpu.memory_space<vmem>>, vector<8x256xf32>
      tpu.vector_store %arg9[%c0_6, %c0_7], %11 {strides = array<i32>} : memref<8x256xf32, #tpu.memory_space<vmem>>, vector<8x256xf32>,
    } else {
    }
    %5 = arith.index_cast %arg1 : i32 to index
    %6 = memref.load %arg2[%5] : memref<4xi32, #tpu.memory_space<smem>>
    %c0_i32_2 = arith.constant 0 : i32
    %7 = arith.cmpi ne, %6, %c0_i32_2 : i32
    %8 = arith.extui %7 : i1 to i32
    %c0_i32_3 = arith.constant 0 : i32
    %9 = arith.cmpi ne, %8, %c0_i32_3 : i32
    scf.if %9 {
      %c0_4 = arith.constant 0 : index
      %c0_5 = arith.constant 0 : index
      %10 = vector.load %arg8[%c0_4, %c0_5] : memref<8x1xi32, #tpu.memory_space<vmem>>, vector<8x1xi32>
      %11 = vector.broadcast %arg1 : i32 to vector<8x1xi32>
      %12 = arith.cmpi eq, %10, %11 : vector<8x1xi32>
      %cst = arith.constant 0.000000e+00 : bf16
      %13 = vector.broadcast %cst : bf16 to vector<8x128xbf16>
      %14 = vector.shape_cast %12 : vector<8x1xi1> to vector<8x1xi1>
      %15 = vector.broadcast %14 : vector<8x1xi1> to vector<8x128xi1>
      %16 = arith.select %15, %1, %13 : vector<8x128xi1>, vector<8x128xbf16>
      %c0_6 = arith.constant 0 : index
      %c0_7 = arith.constant 0 : index
      %c0_8 = arith.constant 0 : index
      %17 = vector.load %arg6[%c0_6, %c0_7, %c0_8] : memref<1x16x256xi32, #tpu.memory_space<vmem>>, vector<1x16x256xi32>
      %18 = vector.shape_cast %17 : vector<1x16x256xi32> to vector<16x256xi32>
      %c0_i32_9 = arith.constant 0 : i32
      %19 = vector.broadcast %c0_i32_9 : i32 to vector<16x256xi32>
      %20 = arith.shrsi %18, %19 : vector<16x256xi32>
      %c15_i32 = arith.constant 15 : i32
      %21 = vector.broadcast %c15_i32 : i32 to vector<16x256xi32>
      %22 = arith.andi %20, %21 : vector<16x256xi32>
      %23 = arith.sitofp %22 : vector<16x256xi32> to vector<16x256xbf16>
      %c4_i32 = arith.constant 4 : i32
      %24 = vector.broadcast %c4_i32 : i32 to vector<16x256xi32>
      %25 = arith.shrsi %18, %24 : vector<16x256xi32>
      %c15_i32_10 = arith.constant 15 : i32
      %26 = vector.broadcast %c15_i32_10 : i32 to vector<16x256xi32>
      %27 = arith.andi %25, %26 : vector<16x256xi32>
      %28 = arith.sitofp %27 : vector<16x256xi32> to vector<16x256xbf16>
      %c8_i32 = arith.constant 8 : i32
      %29 = vector.broadcast %c8_i32 : i32 to vector<16x256xi32>
      %30 = arith.shrsi %18, %29 : vector<16x256xi32>
      %c15_i32_11 = arith.constant 15 : i32
      %31 = vector.broadcast %c15_i32_11 : i32 to vector<16x256xi32>
      %32 = arith.andi %30, %31 : vector<16x256xi32>
      %33 = arith.sitofp %32 : vector<16x256xi32> to vector<16x256xbf16>
      %c12_i32 = arith.constant 12 : i32
      %34 = vector.broadcast %c12_i32 : i32 to vector<16x256xi32>
      %35 = arith.shrsi %18, %34 : vector<16x256xi32>
      %c15_i32_12 = arith.constant 15 : i32
      %36 = vector.broadcast %c15_i32_12 : i32 to vector<16x256xi32>
      %37 = arith.andi %35, %36 : vector<16x256xi32>
      %38 = arith.sitofp %37 : vector<16x256xi32> to vector<16x256xbf16>
      %c16_i32 = arith.constant 16 : i32
      %39 = vector.broadcast %c16_i32 : i32 to vector<16x256xi32>
      %40 = arith.shrsi %18, %39 : vector<16x256xi32>
      %c15_i32_13 = arith.constant 15 : i32
      %41 = vector.broadcast %c15_i32_13 : i32 to vector<16x256xi32>
      %42 = arith.andi %40, %41 : vector<16x256xi32>
      %43 = arith.sitofp %42 : vector<16x256xi32> to vector<16x256xbf16>
      %c20_i32 = arith.constant 20 : i32
      %44 = vector.broadcast %c20_i32 : i32 to vector<16x256xi32>
      %45 = arith.shrsi %18, %44 : vector<16x256xi32>
      %c15_i32_14 = arith.constant 15 : i32
      %46 = vector.broadcast %c15_i32_14 : i32 to vector<16x256xi32>
      %47 = arith.andi %45, %46 : vector<16x256xi32>
      %48 = arith.sitofp %47 : vector<16x256xi32> to vector<16x256xbf16>
      %c24_i32 = arith.constant 24 : i32
      %49 = vector.broadcast %c24_i32 : i32 to vector<16x256xi32>
      %50 = arith.shrsi %18, %49 : vector<16x256xi32>
      %c15_i32_15 = arith.constant 15 : i32
      %51 = vector.broadcast %c15_i32_15 : i32 to vector<16x256xi32>
      %52 = arith.andi %50, %51 : vector<16x256xi32>
      %53 = arith.sitofp %52 : vector<16x256xi32> to vector<16x256xbf16>
      %c28_i32 = arith.constant 28 : i32
      %54 = vector.broadcast %c28_i32 : i32 to vector<16x256xi32>
      %55 = arith.shrsi %18, %54 : vector<16x256xi32>
      %c15_i32_16 = arith.constant 15 : i32
      %56 = vector.broadcast %c15_i32_16 : i32 to vector<16x256xi32>
      %57 = arith.andi %55, %56 : vector<16x256xi32>
      %58 = arith.sitofp %57 : vector<16x256xi32> to vector<16x256xbf16>
      %59 = tpu.concatenate %23, %28, %33, %38, %43, %48, %53, %58 in 0 : vector<16x256xbf16>, vector<16x256xbf16>, vector<16x256xbf16>, vector<16x256xbf16>, vector<16x256xbf16>, vector<16x256xbf16>, vector<16x256xbf16>, vector<16x256xbf16> -> vector<128x256xbf16>
      %cst_17 = arith.constant dense<0.000000e+00> : vector<8x256xf32>
      %60 = tpu.matmul %16, %59, %cst_17 {dimension_numbers = #tpu.dot_dimension_numbers<[1], [0], [0], [1], [0, 0, 1, 1], [], []>} : vector<8x128xbf16>, vector<128x256xbf16>, vector<8x256xf32> -> vector<8x256xf32>
      %61 = arith.extf %16 : vector<8x128xbf16> to vector<8x128xf32>
      %cst_18 = arith.constant dense<0.000000e+00> : vector<8xf32>
      %62 = vector.multi_reduction <add>, %61, %cst_18 [1] : vector<8x128xf32> to vector<8xf32>
      %63 = vector.shape_cast %62 : vector<8xf32> to vector<8x1xf32>
      %64 = arith.index_cast %arg1 : i32 to index
      %c0_19 = arith.constant 0 : index
      %c0_20 = arith.constant 0 : index
      %65 = vector.load %arg7[%64, %c0_19, %c0_20] : memref<4x1x256xf32, #tpu.memory_space<vmem>>, vector<1x1x256xf32>
      %66 = vector.shape_cast %65 : vector<1x1x256xf32> to vector<1x256xf32>
      %c0_21 = arith.constant 0 : index
      %c0_22 = arith.constant 0 : index
      %67 = vector.load %arg9[%c0_21, %c0_22] : memref<8x256xf32, #tpu.memory_space<vmem>>, vector<8x256xf32>
      %cst_23 = arith.constant 8.000000e+00 : f32
      %68 = vector.broadcast %cst_23 : f32 to vector<8x1xf32>
      %69 = arith.mulf %68, %63 : vector<8x1xf32>
      %70 = vector.broadcast %69 : vector<8x1xf32> to vector<8x256xf32>
      %71 = arith.subf %60, %70 : vector<8x256xf32>
      %72 = vector.broadcast %66 : vector<1x256xf32> to vector<8x256xf32>
      %73 = arith.mulf %71, %72 : vector<8x256xf32>
      %74 = arith.addf %67, %73 : vector<8x256xf32>
      %c0_24 = arith.constant 0 : index
      %c0_25 = arith.constant 0 : index
      %75 = vector.load %arg9[%c0_24, %c0_25] : memref<8x256xf32, #tpu.memory_space<vmem>>, vector<8x256xf32>
      tpu.vector_store %arg9[%c0_24, %c0_25], %74 {strides = array<i32>} : memref<8x256xf32, #tpu.memory_space<vmem>>, vector<8x256xf32>,
    } else {
    }
    return
  }
  func.func @transform_0(%arg0: i32, %arg1: i32, %arg2: memref<4xi32, #tpu.memory_space<smem>>, %arg3: memref<4xi32, #tpu.memory_space<smem>>) -> (i32, i32) {
    %c0_i32 = arith.constant 0 : i32
    %c0_i32_0 = arith.constant 0 : i32
    %c0_i32_1 = arith.constant 0 : i32
    return %c0_i32, %c0_i32_0 : i32, i32
  }
  func.func @transform_1(%arg0: i32, %arg1: i32, %arg2: memref<4xi32, #tpu.memory_space<smem>>, %arg3: memref<4xi32, #tpu.memory_space<smem>>) -> (i32, i32) {
    %c0_i32 = arith.constant 0 : i32
    %c0_i32_0 = arith.constant 0 : i32
    return %c0_i32, %arg0 : i32, i32
  }
  func.func @transform_2(%arg0: i32, %arg1: i32, %arg2: memref<4xi32, #tpu.memory_space<smem>>, %arg3: memref<4xi32, #tpu.memory_space<smem>>) -> (i32, i32, i32) {
    %0 = arith.index_cast %arg1 : i32 to index
    %1 = memref.load %arg3[%0] : memref<4xi32, #tpu.memory_space<smem>>
    %c0_i32 = arith.constant 0 : i32
    %c0_i32_0 = arith.constant 0 : i32
    return %1, %c0_i32, %arg0 : i32, i32, i32
  }
  func.func @transform_3(%arg0: i32, %arg1: i32, %arg2: memref<4xi32, #tpu.memory_space<smem>>, %arg3: memref<4xi32, #tpu.memory_space<smem>>) -> (i32, i32, i32) {
    %c0_i32 = arith.constant 0 : i32
    %c0_i32_0 = arith.constant 0 : i32
    %c0_i32_1 = arith.constant 0 : i32
    return %c0_i32, %c0_i32_0, %arg0 : i32, i32, i32
  }
  func.func @transform_4(%arg0: i32, %arg1: i32, %arg2: memref<4xi32, #tpu.memory_space<smem>>, %arg3: memref<4xi32, #tpu.memory_space<smem>>) -> (i32, i32) {
    %c0_i32 = arith.constant 0 : i32
    %c0_i32_0 = arith.constant 0 : i32
    %c0_i32_1 = arith.constant 0 : i32
    return %c0_i32, %c0_i32_0 : i32, i32
  }
  func.func @transform_5(%arg0: i32, %arg1: i32, %arg2: memref<4xi32, #tpu.memory_space<smem>>, %arg3: memref<4xi32, #tpu.memory_space<smem>>) -> (i32, i32) {
    %c0_i32 = arith.constant 0 : i32
    %c0_i32_0 = arith.constant 0 : i32
    return %c0_i32, %arg0 : i32, i32
  }
}

</mosaic_0001>

<llo_original>
// kernel: tpu_custom_call.1
$region0: #{tpu_custom_call.1}
  #allocation0 [shape = 'u32[]', space=smem, size = 0x4, offset = 0x4, fixed_abs, tag = 'smem constant byte address 0x4 - core index']
  #allocation1 [shape = 'u32[72,128]{1,0:T(1,128)}', space=vmem, size = 0x9000, scoped, tag = 'internal scratch']
  #allocation2 [shape = 's32[1]{0}', space=sflag, size = 0x4, scoped, tag = 'scoped memory for tpu_custom_call.1']
  #allocation3 [shape = 'u8[512]{0}', space=smem, size = 0x200, scoped, tag = 'prefetched SMEM operand 0']
  #allocation4 [shape = 'u8[512]{0}', space=smem, size = 0x200, scoped, tag = 'prefetched SMEM operand 1']
  %s0 = inlined_call_operand.vmem [shape: s32[4], index: 0, kind: input, shape index: {}]
  %s1 = inlined_call_operand.hbm [shape: s32[4], index: 1, kind: input, shape index: {}]
  %s2 = inlined_call_operand.vmem [shape: f32[8,128], index: 2, kind: input, shape index: {}]
  %s3 = inlined_call_operand.hbm [shape: bf16[128,512], index: 3, kind: input, shape index: {}]
  %s4 = inlined_call_operand.hbm [shape: s32[4,16,512], index: 4, kind: input, shape index: {}]
  %s5 = inlined_call_operand.hbm [shape: f32[4,1,512], index: 5, kind: input, shape index: {}]
  %s6 = inlined_call_operand.vmem [shape: s32[8,1], index: 6, kind: input, shape index: {}]
  %s7 = inlined_call_operand.hbm [shape: f32[8,512], index: 7, kind: output, shape index: {}]
  %s8 = sld [smem:[#allocation0]]
  $region73: #{tpu_custom_call.1} parent=0
    _
  %s10 = ssub.s32 1, %s8
  %s11 = scalar_select 0, %s10, %s8
  %s13 = sshll.u32 %s0, 4
  %s14 = int_to_ptr.vmem [resolvable:$true] %s13
  %16 = dma.vmem_to_smem %s14, 16, [#allocation3], [#allocation2]
  %s18 = sshll.u32 %s1, 4
  %s19 = int_to_ptr.hbm [resolvable:$true] %s18
  %21 = dma.hbm_to_smem %s19, 16, [#allocation4], [#allocation2]
  %23 = dma.done [#allocation2], 32
  %24 = sfence
  $region1: #{tpu_custom_call.1} parent=0
    #allocation5 [shape = 'u8[131072]{0}', space=vmem, size = 0x20000, scoped, tag = 'input window, operand 3']
    #allocation6 [shape = 's32[2]{0}', space=sflag, size = 0x8, scoped, tag = 'scoped memory for tpu_custom_call.1']
    #allocation7 [shape = 's32[2]{0}', space=sflag, size = 0x8, scoped, tag = 'scoped memory for tpu_custom_call.1']
    #allocation8 [shape = 'u8[32768]{0}', space=vmem, size = 0x8000, scoped, tag = 'input window, operand 4']
    #allocation9 [shape = 's32[2]{0}', space=sflag, size = 0x8, scoped, tag = 'scoped memory for tpu_custom_call.1']
    #allocation10 [shape = 'u8[8192]{0}', space=vmem, size = 0x2000, scoped, tag = 'input window, operand 5']
    #allocation11 [shape = 'u8[16384]{0}', space=vmem, size = 0x4000, scoped, tag = 'output window, operand 0']
    %25 = vsyncpa [#allocation6], 0
    %s26 = scalar_lea.sflag [#allocation6], 1
    %27 = vsyncpa %s26, 0
    %28 = vsyncpa [#allocation9], 0
    %s29 = scalar_lea.sflag [#allocation9], 1
    %30 = vsyncpa %s29, 0
    %31 = vsyncpa [#allocation7], 0
    %s32 = scalar_lea.sflag [#allocation7], 1
    %33 = vsyncpa %s32, 0
    loop: start=0, step=1, limit=10
    $region2: #{tpu_custom_call.1} parent=1 // loop_pre_header
      _
    $region3: #{tpu_custom_call.1} parent=1 // loop_header
      %s35 = sphi 0, %s39
      %p36 = scmp.ge.s32.totalorder %s35, 10
      %s42 = sphi 0, %s54
      %s43 = sphi 0, %s50
      %s44 = sphi 0, %s42
      %s45 = sphi 0, %s43
      %s46 = sphi 0, %s44
      %s47 = sphi 0, %s45
      %s55 = sphi 0, %s55
      %s57 = sphi 0, %s55
      %s58 = sphi 0, %s57
      %s72 = sphi 0, %s58
      %s78 = sphi 0, %s80
      %s81 = sphi 0, %s78
      %s82 = sphi 0, %s81
      %s98 = sphi 0, %s82
      %s108 = sphi 0, %s110
      %s111 = sphi 0, %s108
      %s112 = sphi 0, %s111
      %s128 = sphi 0, %s112
      %s134 = sphi 0, %s136
      %s137 = sphi 0, %s134
      %s138 = sphi 0, %s137
      %s154 = sphi 0, %s138
      %s158 = sphi 0, %s158
      %s160 = sphi 0, %s158
      %s161 = sphi 0, %s160
      %s175 = sphi 0, %s161
      %s181 = sphi 0, %s183
      %s184 = sphi 0, %s181
      %s185 = sphi 0, %s184
      %s201 = sphi 0, %s185
    $region4: #{tpu_custom_call.1} parent=1 // loop_header_branch
      %38 = sbr.rel (%p36) target = $region8
    $region5: #{tpu_custom_call.1} parent=1 // loop_body
      %s40 = ssub.s32 %s35, 1
      %s41 = ssub.s32 %s35, 2
      %s48 = sadd.s32 1, %s43
      %p49 = scmp.ge.s32.totalorder %s48, 4
      %s50 = scalar_select %p49, 0, %s48
      %s51 = sadd.s32 1, %s42
      %s52 = scalar_select %p49, %s51, %s42
      %p53 = scmp.ge.s32.totalorder %s52, 2
      %s54 = scalar_select %p53, 0, %s52
      %s56 = sadd.s32 %s55, 1
      %p59 = scmp.eq.s32.totalorder %s35, 7
      %p60 = scmp.ne.s32.totalorder %s55, %s57
      %p61 = scmp.eq.s32.totalorder %s35, 0
      %p62 = por %p60, %p61
      %p63 = scmp.ne.s32.totalorder %s55, %s57
      %p64 = scmp.eq.s32.totalorder %s40, 7
      %p65 = por %p63, %p64
      %p66 = scmp.ne.s32.totalorder %s57, %s58
      %p67 = scmp.eq.s32.totalorder %s40, 0
      %p68 = por %p66, %p67
      %p69 = scmp.ne.s32.totalorder %s57, %s58
      %p70 = scmp.eq.s32.totalorder %s41, 7
      %p71 = por %p69, %p70
      %p73 = scmp.ne.s32.totalorder %s58, %s72
      %p74 = scmp.eq.s32.totalorder %s41, 0
      %p75 = por %p73, %p74
      %s76 = ssub.s32 %s42, %s54
      %p77 = scmp.eq.s32.totalorder %s76, 0
      %s79 = sadd.s32 %s78, 1
      %s80 = scalar_select %p77, %s78, %s79
      %p83 = pneg %p77
      %p84 = scmp.eq.s32.totalorder %s35, 7
      %p85 = por %p83, %p84
      %p86 = scmp.ne.s32.totalorder %s78, %s81
      %p87 = scmp.eq.s32.totalorder %s35, 0
      %p88 = por %p86, %p87
      %p89 = scmp.ne.s32.totalorder %s78, %s81
      %p90 = scmp.eq.s32.totalorder %s40, 7
      %p91 = por %p89, %p90
      %p92 = scmp.ne.s32.totalorder %s81, %s82
      %p93 = scmp.eq.s32.totalorder %s40, 0
      %p94 = por %p92, %p93
      %p95 = scmp.ne.s32.totalorder %s81, %s82
      %p96 = scmp.eq.s32.totalorder %s41, 7
      %p97 = por %p95, %p96
      %p99 = scmp.ne.s32.totalorder %s82, %s98
      %p100 = scmp.eq.s32.totalorder %s41, 0
      %p101 = por %p99, %p100
      %s102 = sld [smem:[#allocation4 + %s43]]
      %s103 = sld [smem:[#allocation4 + %s50]]
      %s104 = ssub.s32 %s102, %s103
      %s105 = ssub.s32 %s42, %s54
      %s106 = sor.u32 %s104, %s105
      %p107 = scmp.eq.s32.totalorder %s106, 0
      %s109 = sadd.s32 %s108, 1
      %s110 = scalar_select %p107, %s108, %s109
      %p113 = pneg %p107
      %p114 = scmp.eq.s32.totalorder %s35, 7
      %p115 = por %p113, %p114
      %p116 = scmp.ne.s32.totalorder %s108, %s111
      %p117 = scmp.eq.s32.totalorder %s35, 0
      %p118 = por %p116, %p117
      %p119 = scmp.ne.s32.totalorder %s108, %s111
      %p120 = scmp.eq.s32.totalorder %s40, 7
      %p121 = por %p119, %p120
      %p122 = scmp.ne.s32.totalorder %s111, %s112
      %p123 = scmp.eq.s32.totalorder %s40, 0
      %p124 = por %p122, %p123
      %p125 = scmp.ne.s32.totalorder %s111, %s112
      %p126 = scmp.eq.s32.totalorder %s41, 7
      %p127 = por %p125, %p126
      %p129 = scmp.ne.s32.totalorder %s112, %s128
      %p130 = scmp.eq.s32.totalorder %s41, 0
      %p131 = por %p129, %p130
      %s132 = ssub.s32 %s42, %s54
      %p133 = scmp.eq.s32.totalorder %s132, 0
      %s135 = sadd.s32 %s134, 1
      %s136 = scalar_select %p133, %s134, %s135
      %p139 = pneg %p133
      %p140 = scmp.eq.s32.totalorder %s35, 7
      %p141 = por %p139, %p140
      %p142 = scmp.ne.s32.totalorder %s134, %s137
      %p143 = scmp.eq.s32.totalorder %s35, 0
      %p144 = por %p142, %p143
      %p145 = scmp.ne.s32.totalorder %s134, %s137
      %p146 = scmp.eq.s32.totalorder %s40, 7
      %p147 = por %p145, %p146
      %p148 = scmp.ne.s32.totalorder %s137, %s138
      %p149 = scmp.eq.s32.totalorder %s40, 0
      %p150 = por %p148, %p149
      %p151 = scmp.ne.s32.totalorder %s137, %s138
      %p152 = scmp.eq.s32.totalorder %s41, 7
      %p153 = por %p151, %p152
      %p155 = scmp.ne.s32.totalorder %s138, %s154
      %p156 = scmp.eq.s32.totalorder %s41, 0
      %p157 = por %p155, %p156
      %s159 = sadd.s32 %s158, 1
      %p162 = scmp.eq.s32.totalorder %s35, 7
      %p163 = scmp.ne.s32.totalorder %s158, %s160
      %p164 = scmp.eq.s32.totalorder %s35, 0
      %p165 = por %p163, %p164
      %p166 = scmp.ne.s32.totalorder %s158, %s160
      %p167 = scmp.eq.s32.totalorder %s40, 7
      %p168 = por %p166, %p167
      %p169 = scmp.ne.s32.totalorder %s160, %s161
      %p170 = scmp.eq.s32.totalorder %s40, 0
      %p171 = por %p169, %p170
      %p172 = scmp.ne.s32.totalorder %s160, %s161
      %p173 = scmp.eq.s32.totalorder %s41, 7
      %p174 = por %p172, %p173
      %p176 = scmp.ne.s32.totalorder %s161, %s175
      %p177 = scmp.eq.s32.totalorder %s41, 0
      %p178 = por %p176, %p177
      %s179 = ssub.s32 %s42, %s54
      %p180 = scmp.eq.s32.totalorder %s179, 0
      %s182 = sadd.s32 %s181, 1
      %s183 = scalar_select %p180, %s181, %s182
      %p186 = pneg %p180
      %p187 = scmp.eq.s32.totalorder %s35, 7
      %p188 = por %p186, %p187
      %p189 = scmp.ne.s32.totalorder %s181, %s184
      %p190 = scmp.eq.s32.totalorder %s35, 0
      %p191 = por %p189, %p190
      %p192 = scmp.ne.s32.totalorder %s181, %s184
      %p193 = scmp.eq.s32.totalorder %s40, 7
      %p194 = por %p192, %p193
      %p195 = scmp.ne.s32.totalorder %s184, %s185
      %p196 = scmp.eq.s32.totalorder %s40, 0
      %p197 = por %p195, %p196
      %p198 = scmp.ne.s32.totalorder %s184, %s185
      %p199 = scmp.eq.s32.totalorder %s41, 7
      %p200 = por %p198, %p199
      %p202 = scmp.ne.s32.totalorder %s185, %s201
      %p203 = scmp.eq.s32.totalorder %s41, 0
      %p204 = por %p202, %p203
      %p205 = scmp.le.s32.totalorder 1, %s35
      %p206 = scmp.lt.s32.totalorder %s35, 9
      %p207 = pnand %p205, %p206
      %p208 = pneg %p207
      // Predicated region
      $region9: #{tpu_custom_call.1} parent=5 // pred_check
        _
      $region10: #{tpu_custom_call.1} parent=5 // pred_check_branch
        %210 = sbr.rel (%p207) target = $region12
      $region11: #{tpu_custom_call.1} parent=5 // pred_region
        %s211 = ssub.s32 %s35, 1
        // Predicated region
        $region13: #{tpu_custom_call.1} parent=11 // pred_check
          %p212 = pneg %p68
        $region14: #{tpu_custom_call.1} parent=11 // pred_check_branch
          %214 = sbr.rel (%p212) target = $region16
        $region15: #{tpu_custom_call.1} parent=11 // pred_region
          _
        $region16: #{tpu_custom_call.1} parent=11 // pred_fallthru
          _
        // Predicated region
        $region17: #{tpu_custom_call.1} parent=11 // pred_check
          %p215 = pneg %p171
        $region18: #{tpu_custom_call.1} parent=11 // pred_check_branch
          %217 = sbr.rel (%p215) target = $region20
        $region19: #{tpu_custom_call.1} parent=11 // pred_region
          _
        $region20: #{tpu_custom_call.1} parent=11 // pred_fallthru
          _
      $region12: #{tpu_custom_call.1} parent=5 // pred_fallthru
        _
      %p218 = scmp.lt.s32.totalorder %s35, 8
      // Predicated region
      $region21: #{tpu_custom_call.1} parent=5 // pred_check
        %p219 = pneg %p218
      $region22: #{tpu_custom_call.1} parent=5 // pred_check_branch
        %221 = sbr.rel (%p219) target = $region24
      $region23: #{tpu_custom_call.1} parent=5 // pred_region
        // Predicated region
        $region25: #{tpu_custom_call.1} parent=23 // pred_check
          %p222 = pneg %p88
        $region26: #{tpu_custom_call.1} parent=23 // pred_check_branch
          %224 = sbr.rel (%p222) target = $region28
        $region27: #{tpu_custom_call.1} parent=23 // pred_region
          %s225 = sand.u32 %s78, 1
          %s226 = scalar_lea.sflag [#allocation6], %s225
          %s227 = sand.u32 %s78, 1
          %s228 = smul.addr %s227, 128
          %s229 = scalar_lea.vmem [#allocation5], %s228
          %s230 = smul.u32 2, %s42
          %232 = vsyncadd %s226, 0
          %s233 = smul.addr %s230, 4
          %s234 = scalar_lea.hbm %s3, %s233
          %s235 = sshll.u32 %s234, 4
          %s236 = int_to_ptr.hbm [resolvable:$true] %s235
          %s237 = sshll.u32 %s229, 4
          %s238 = int_to_ptr.vmem [resolvable:$true] %s237
          %243 = dma.hbm_to_vmem [thread:$0]  %s236, 2048, %s238, %s226, 256, 128, 8
        $region28: #{tpu_custom_call.1} parent=23 // pred_fallthru
          _
        // Predicated region
        $region29: #{tpu_custom_call.1} parent=23 // pred_check
          %p244 = pneg %p118
        $region30: #{tpu_custom_call.1} parent=23 // pred_check_branch
          %246 = sbr.rel (%p244) target = $region32
        $region31: #{tpu_custom_call.1} parent=23 // pred_region
          %s247 = sand.u32 %s35, 1
          %s248 = scalar_lea.sflag [#allocation9], %s247
          %s249 = sand.u32 %s108, 1
          %s250 = smul.addr %s249, 32
          %s251 = scalar_lea.vmem [#allocation8], %s250
          %s252 = sld [smem:[#allocation4 + %s43]]
          %s253 = smul.u32 2, %s42
          %255 = vsyncadd %s248, 0
          %s256 = smul.addr %s252, 8
          %s257 = sadd.s32 %s253, %s256
          %s258 = smul.addr %s257, 8
          %s259 = scalar_lea.hbm %s4, %s258
          %s260 = sshll.u32 %s259, 4
          %s261 = int_to_ptr.hbm [resolvable:$true] %s260
          %s262 = sshll.u32 %s251, 4
          %s263 = int_to_ptr.vmem [resolvable:$true] %s262
          %268 = dma.hbm_to_vmem [thread:$0]  %s261, 512, %s263, %s248, 512, 256, 16
        $region32: #{tpu_custom_call.1} parent=23 // pred_fallthru
          _
        // Predicated region
        $region33: #{tpu_custom_call.1} parent=23 // pred_check
          %p269 = pneg %p144
        $region34: #{tpu_custom_call.1} parent=23 // pred_check_branch
          %271 = sbr.rel (%p269) target = $region36
        $region35: #{tpu_custom_call.1} parent=23 // pred_region
          %s272 = sand.u32 %s35, 1
          %s273 = scalar_lea.sflag [#allocation9], %s272
          %s274 = sand.u32 %s134, 1
          %s275 = smul.addr %s274, 8
          %s276 = scalar_lea.vmem [#allocation10], %s275
          %s277 = smul.u32 2, %s42
          %279 = vsyncadd %s273, 0
          %s280 = scalar_lea.hbm %s5, %s277
          %s281 = sshll.u32 %s280, 4
          %s282 = int_to_ptr.hbm [resolvable:$true] %s281
          %s283 = sshll.u32 %s276, 4
          %s284 = int_to_ptr.vmem [resolvable:$true] %s283
          %289 = dma.hbm_to_vmem [thread:$0]  %s282, 128, %s284, %s273, 64, 32, 2
        $region36: #{tpu_custom_call.1} parent=23 // pred_fallthru
          _
      $region24: #{tpu_custom_call.1} parent=5 // pred_fallthru
        _
      %p290 = scmp.le.s32.totalorder 1, %s35
      %p291 = scmp.lt.s32.totalorder %s35, 9
      %p292 = pnand %p290, %p291
      %p293 = pneg %p292
      // Predicated region
      $region37: #{tpu_custom_call.1} parent=5 // pred_check
        _
      $region38: #{tpu_custom_call.1} parent=5 // pred_check_branch
        %295 = sbr.rel (%p292) target = $region40
      $region39: #{tpu_custom_call.1} parent=5 // pred_region
        %s296 = ssub.s32 %s35, 1
        %s297 = sand.u32 %s81, 1
        %s298 = scalar_lea.sflag [#allocation6], %s297
        %s299 = sand.u32 %s81, 1
        %s300 = smul.addr %s299, 128
        %s301 = scalar_lea.vmem [#allocation5], %s300
        // Predicated region
        $region41: #{tpu_custom_call.1} parent=39 // pred_check
          %p302 = pneg %p94
        $region42: #{tpu_custom_call.1} parent=39 // pred_check_branch
          %304 = sbr.rel (%p302) target = $region44
        $region43: #{tpu_custom_call.1} parent=39 // pred_region
          %306 = dma.done %s298, 2048
        $region44: #{tpu_custom_call.1} parent=39 // pred_fallthru
          _
        %s307 = sand.u32 %s40, 1
        %s308 = scalar_lea.sflag [#allocation9], %s307
        %s309 = sand.u32 %s111, 1
        %s310 = smul.addr %s309, 32
        %s311 = scalar_lea.vmem [#allocation8], %s310
        // Predicated region
        $region45: #{tpu_custom_call.1} parent=39 // pred_check
          %p312 = pneg %p124
        $region46: #{tpu_custom_call.1} parent=39 // pred_check_branch
          %314 = sbr.rel (%p312) target = $region48
        $region47: #{tpu_custom_call.1} parent=39 // pred_region
          %316 = dma.done %s308, 512
        $region48: #{tpu_custom_call.1} parent=39 // pred_fallthru
          _
        %s317 = sand.u32 %s40, 1
        %s318 = scalar_lea.sflag [#allocation9], %s317
        %s319 = sand.u32 %s137, 1
        %s320 = smul.addr %s319, 8
        %s321 = scalar_lea.vmem [#allocation10], %s320
        // Predicated region
        $region49: #{tpu_custom_call.1} parent=39 // pred_check
          %p322 = pneg %p150
        $region50: #{tpu_custom_call.1} parent=39 // pred_check_branch
          %324 = sbr.rel (%p322) target = $region52
        $region51: #{tpu_custom_call.1} parent=39 // pred_region
          %326 = dma.done %s318, 128
        $region52: #{tpu_custom_call.1} parent=39 // pred_fallthru
          _
        %p327 = pneg %p68
        %p328 = pneg %p65
        %s329 = sand.u32 %s81, 1
        %s330 = scalar_lea.sflag [#allocation6], %s329
        %s331 = sand.u32 %s81, 1
        %s332 = smul.addr %s331, 128
        %s333 = scalar_lea.vmem [#allocation5], %s332
        %p334 = pneg %p94
        %p335 = pneg %p91
        %s336 = sand.u32 %s40, 1
        %s337 = scalar_lea.sflag [#allocation9], %s336
        %s338 = sand.u32 %s111, 1
        %s339 = smul.addr %s338, 32
        %s340 = scalar_lea.vmem [#allocation8], %s339
        %p341 = pneg %p124
        %p342 = pneg %p121
        %s343 = sand.u32 %s40, 1
        %s344 = scalar_lea.sflag [#allocation9], %s343
        %s345 = sand.u32 %s137, 1
        %s346 = smul.addr %s345, 8
        %s347 = scalar_lea.vmem [#allocation10], %s346
        %p348 = pneg %p150
        %p349 = pneg %p147
        %p350 = pneg %p171
        %p351 = pneg %p168
        %p352 = pneg %p197
        %p353 = pneg %p194
        %s354 = sand.u32 %s184, 1
        %s355 = scalar_lea.sflag [#allocation7], %s354
        %s356 = sand.u32 %s184, 1
        %s357 = smul.addr %s356, 16
        %s358 = scalar_lea.vmem [#allocation11], %s357
        %s359 = smul.u32 2, %s44
        %s360 = sld [smem:[#allocation4 + %s45]]
        %s361 = smul.u32 2, %s44
        %s362 = smul.u32 2, %s44
        %s363 = smul.u32 2, %s44
        %v365 = vld [vmem:[%s2] sm:$0xff]
        %v366 = vpack.c.bf16 %v365, %v365
        %p367 = scmp.eq.s32.totalorder %s45, 0
        // Predicated region
        $region53: #{tpu_custom_call.1} parent=39 // pred_check
          %p368 = pneg %p367
        $region54: #{tpu_custom_call.1} parent=39 // pred_check_branch
          %370 = sbr.rel (%p368) target = $region56
        $region55: #{tpu_custom_call.1} parent=39 // pred_region
          %v371 = vld [vmem:[%s301] sm:$0xff]
          %v372 = vld [vmem:[%s301 + $0x8] sm:$0xff]
          %v373 = vld [vmem:[%s301 + $0x10] sm:$0xff]
          %v374 = vld [vmem:[%s301 + $0x18] sm:$0xff]
          %v375 = vld [vmem:[%s301 + $0x20] sm:$0xff]
          %v376 = vld [vmem:[%s301 + $0x28] sm:$0xff]
          %v377 = vld [vmem:[%s301 + $0x30] sm:$0xff]
          %v378 = vld [vmem:[%s301 + $0x38] sm:$0xff]
          %v379 = vld [vmem:[%s301 + $0x40] sm:$0xff]
          %v380 = vld [vmem:[%s301 + $0x48] sm:$0xff]
          %v381 = vld [vmem:[%s301 + $0x50] sm:$0xff]
          %v382 = vld [vmem:[%s301 + $0x58] sm:$0xff]
          %v383 = vld [vmem:[%s301 + $0x60] sm:$0xff]
          %v384 = vld [vmem:[%s301 + $0x68] sm:$0xff]
          %v385 = vld [vmem:[%s301 + $0x70] sm:$0xff]
          %v386 = vld [vmem:[%s301 + $0x78] sm:$0xff]
          %v403 = vunpack.c.l.b16 %v371
          %v404 = vunpack.c.h.b16 %v371
          %v405 = vunpack.c.l.b16 %v372
          %v406 = vunpack.c.h.b16 %v372
          %v407 = vunpack.c.l.b16 %v373
          %v408 = vunpack.c.h.b16 %v373
          %v409 = vunpack.c.l.b16 %v374
          %v410 = vunpack.c.h.b16 %v374
          %v411 = vunpack.c.l.b16 %v375
          %v412 = vunpack.c.h.b16 %v375
          %v413 = vunpack.c.l.b16 %v376
          %v414 = vunpack.c.h.b16 %v376
          %v415 = vunpack.c.l.b16 %v377
          %v416 = vunpack.c.h.b16 %v377
          %v417 = vunpack.c.l.b16 %v378
          %v418 = vunpack.c.h.b16 %v378
          %v419 = vunpack.c.l.b16 %v379
          %v420 = vunpack.c.h.b16 %v379
          %v421 = vunpack.c.l.b16 %v380
          %v422 = vunpack.c.h.b16 %v380
          %v423 = vunpack.c.l.b16 %v381
          %v424 = vunpack.c.h.b16 %v381
          %v425 = vunpack.c.l.b16 %v382
          %v426 = vunpack.c.h.b16 %v382
          %v427 = vunpack.c.l.b16 %v383
          %v428 = vunpack.c.h.b16 %v383
          %v429 = vunpack.c.l.b16 %v384
          %v430 = vunpack.c.h.b16 %v384
          %v431 = vunpack.c.l.b16 %v385
          %v432 = vunpack.c.h.b16 %v385
          %v433 = vunpack.c.l.b16 %v386
          %v434 = vunpack.c.h.b16 %v386
          %v435 = vpack.c.b16 %v405, %v403
          %v436 = vpack.c.b16 %v406, %v404
          %v437 = vpack.c.b16 %v409, %v407
          %v438 = vpack.c.b16 %v410, %v408
          %v439 = vpack.c.b16 %v413, %v411
          %v440 = vpack.c.b16 %v414, %v412
          %v441 = vpack.c.b16 %v417, %v415
          %v442 = vpack.c.b16 %v418, %v416
          %v443 = vpack.c.b16 %v421, %v419
          %v444 = vpack.c.b16 %v422, %v420
          %v445 = vpack.c.b16 %v425, %v423
          %v446 = vpack.c.b16 %v426, %v424
          %v447 = vpack.c.b16 %v429, %v427
          %v448 = vpack.c.b16 %v430, %v428
          %v449 = vpack.c.b16 %v433, %v431
          %v450 = vpack.c.b16 %v434, %v432
          %467 = vmatpush.bf16.msra.mxu0 %v449
          %468 = vmatpush.bf16.msra.mxu0 %v447
          %469 = vmatpush.bf16.msra.mxu0 %v445
          %470 = vmatpush.bf16.msra.mxu0 %v443
          %471 = vmatpush.bf16.msra.mxu0 %v441
          %472 = vmatpush.bf16.msra.mxu0 %v439
          %473 = vmatpush.bf16.msra.mxu0 %v437
          %474 = vmatpush.bf16.msra.mxu0 %v435
          %475 = vmatmul.bf16.gmra.mxu0 %v366
          %v476 = vpop.f32.mrf.mxu0
          %v477 = vadd.f32 0.0, %v476
          %v478 = vpop.f32.mrf.mxu0
          %479 = vdwg.mxu0
          %480 = vmatpush.bf16.msra.mxu0 %v450
          %481 = vmatpush.bf16.msra.mxu0 %v448
          %482 = vmatpush.bf16.msra.mxu0 %v446
          %483 = vmatpush.bf16.msra.mxu0 %v444
          %484 = vmatpush.bf16.msra.mxu0 %v442
          %485 = vmatpush.bf16.msra.mxu0 %v440
          %486 = vmatpush.bf16.msra.mxu0 %v438
          %487 = vmatpush.bf16.msra.mxu0 %v436
          %488 = vmatmul.bf16.gmra.mxu0 %v366
          %v489 = vpop.f32.mrf.mxu0
          %v490 = vadd.f32 0.0, %v489
          %v491 = vpop.f32.mrf.mxu0
          %492 = vdwg.mxu0
          %493 = vst [vmem:[%s358] sm:$0xff] %v477
          %494 = vst [vmem:[%s358 + $0x8] sm:$0xff] %v490
        $region56: #{tpu_custom_call.1} parent=39 // pred_fallthru
          _
        %s495 = sld [smem:[#allocation3 + %s45]]
        %p496 = scmp.ne.s32.totalorder %s495, 0
        // Predicated region
        $region57: #{tpu_custom_call.1} parent=39 // pred_check
          %p497 = pneg %p496
        $region58: #{tpu_custom_call.1} parent=39 // pred_check_branch
          %499 = sbr.rel (%p497) target = $region60
        $region59: #{tpu_custom_call.1} parent=39 // pred_region
          %v500 = vld [vmem:[%s6] sm:$0xff]
          %v501 = vstv %s45
          %vm502 = vcmp.eq.s32.totalorder %v500, %v501
          %v503 = vsel %vm502, 1, 0
          %504 = vset.pattern.permute.xlu0 0
          %505 = vperm.xlu0 %504, %v503
          %v506 = vpop.permute.xlu0 %505
          %vm507 = vcmp.eq.s32.totalorder %v506, 1
          %vm508 = vmpackc.low %vm507, %vm507
          %v509 = vsel %vm508, %v366, 0
          %v510 = vld [vmem:[%s311] sm:$0xff]
          %v511 = vld [vmem:[%s311 + $0x8] sm:$0xff]
          %v512 = vld [vmem:[%s311 + $0x10] sm:$0xff]
          %v513 = vld [vmem:[%s311 + $0x18] sm:$0xff]
          %v514 = vand.u32 %v510, 15
          %v515 = vand.u32 %v511, 15
          %v516 = vand.u32 %v512, 15
          %v517 = vand.u32 %v513, 15
          %v518 = vcvt.s32.f32 %v514
          %v519 = vcvt.s32.f32 %v515
          %v520 = vcvt.s32.f32 %v516
          %v521 = vcvt.s32.f32 %v517
          %v522 = vpack.c.bf16 %v519, %v518
          %v523 = vpack.c.bf16 %v521, %v520
          %v524 = vshra.s32 %v510, 4
          %v525 = vshra.s32 %v511, 4
          %v526 = vshra.s32 %v512, 4
          %v527 = vshra.s32 %v513, 4
          %v528 = vand.u32 %v524, 15
          %v529 = vand.u32 %v525, 15
          %v530 = vand.u32 %v526, 15
          %v531 = vand.u32 %v527, 15
          %v532 = vcvt.s32.f32 %v528
          %v533 = vcvt.s32.f32 %v529
          %v534 = vcvt.s32.f32 %v530
          %v535 = vcvt.s32.f32 %v531
          %v536 = vpack.c.bf16 %v533, %v532
          %v537 = vpack.c.bf16 %v535, %v534
          %v538 = vshra.s32 %v510, 8
          %v539 = vshra.s32 %v511, 8
          %v540 = vshra.s32 %v512, 8
          %v541 = vshra.s32 %v513, 8
          %v542 = vand.u32 %v538, 15
          %v543 = vand.u32 %v539, 15
          %v544 = vand.u32 %v540, 15
          %v545 = vand.u32 %v541, 15
          %v546 = vcvt.s32.f32 %v542
          %v547 = vcvt.s32.f32 %v543
          %v548 = vcvt.s32.f32 %v544
          %v549 = vcvt.s32.f32 %v545
          %v550 = vpack.c.bf16 %v547, %v546
          %v551 = vpack.c.bf16 %v549, %v548
          %v552 = vshra.s32 %v510, 12
          %v553 = vshra.s32 %v511, 12
          %v554 = vshra.s32 %v512, 12
          %v555 = vshra.s32 %v513, 12
          %v556 = vand.u32 %v552, 15
          %v557 = vand.u32 %v553, 15
          %v558 = vand.u32 %v554, 15
          %v559 = vand.u32 %v555, 15
          %v560 = vcvt.s32.f32 %v556
          %v561 = vcvt.s32.f32 %v557
          %v562 = vcvt.s32.f32 %v558
          %v563 = vcvt.s32.f32 %v559
          %v564 = vpack.c.bf16 %v561, %v560
          %v565 = vpack.c.bf16 %v563, %v562
          %v566 = vshra.s32 %v510, 16
          %v567 = vshra.s32 %v511, 16
          %v568 = vshra.s32 %v512, 16
          %v569 = vshra.s32 %v513, 16
          %v570 = vand.u32 %v566, 15
          %v571 = vand.u32 %v567, 15
          %v572 = vand.u32 %v568, 15
          %v573 = vand.u32 %v569, 15
          %v574 = vcvt.s32.f32 %v570
          %v575 = vcvt.s32.f32 %v571
          %v576 = vcvt.s32.f32 %v572
          %v577 = vcvt.s32.f32 %v573
          %v578 = vpack.c.bf16 %v575, %v574
          %v579 = vpack.c.bf16 %v577, %v576
          %v580 = vshra.s32 %v510, 20
          %v581 = vshra.s32 %v511, 20
          %v582 = vshra.s32 %v512, 20
          %v583 = vshra.s32 %v513, 20
          %v584 = vand.u32 %v580, 15
          %v585 = vand.u32 %v581, 15
          %v586 = vand.u32 %v582, 15
          %v587 = vand.u32 %v583, 15
          %v588 = vcvt.s32.f32 %v584
          %v589 = vcvt.s32.f32 %v585
          %v590 = vcvt.s32.f32 %v586
          %v591 = vcvt.s32.f32 %v587
          %v592 = vpack.c.bf16 %v589, %v588
          %v593 = vpack.c.bf16 %v591, %v590
          %v594 = vshra.s32 %v510, 24
          %v595 = vshra.s32 %v511, 24
          %v596 = vshra.s32 %v512, 24
          %v597 = vshra.s32 %v513, 24
          %v598 = vand.u32 %v594, 15
          %v599 = vand.u32 %v595, 15
          %v600 = vand.u32 %v596, 15
          %v601 = vand.u32 %v597, 15
          %v602 = vcvt.s32.f32 %v598
          %v603 = vcvt.s32.f32 %v599
          %v604 = vcvt.s32.f32 %v600
          %v605 = vcvt.s32.f32 %v601
          %v606 = vpack.c.bf16 %v603, %v602
          %v607 = vpack.c.bf16 %v605, %v604
          %v608 = vshra.s32 %v510, 28
          %v609 = vshra.s32 %v511, 28
          %v610 = vshra.s32 %v512, 28
          %v611 = vshra.s32 %v513, 28
          %v612 = vand.u32 %v608, 15
          %v613 = vand.u32 %v609, 15
          %v614 = vand.u32 %v610, 15
          %v615 = vand.u32 %v611, 15
          %v616 = vcvt.s32.f32 %v612
          %v617 = vcvt.s32.f32 %v613
          %v618 = vcvt.s32.f32 %v614
          %v619 = vcvt.s32.f32 %v615
          %v620 = vpack.c.bf16 %v617, %v616
          %v621 = vpack.c.bf16 %v619, %v618
          %v624 = vunpack.c.l.b16 %v522
          %v625 = vunpack.c.h.b16 %v522
          %v626 = vunpack.c.l.b16 %v523
          %v627 = vunpack.c.h.b16 %v523
          %v628 = vpack.c.b16 %v626, %v624
          %v629 = vpack.c.b16 %v627, %v625
          %v634 = vunpack.c.l.b16 %v536
          %v635 = vunpack.c.h.b16 %v536
          %v636 = vunpack.c.l.b16 %v537
          %v637 = vunpack.c.h.b16 %v537
          %v638 = vpack.c.b16 %v636, %v634
          %v639 = vpack.c.b16 %v637, %v635
          %v644 = vunpack.c.l.b16 %v550
          %v645 = vunpack.c.h.b16 %v550
          %v646 = vunpack.c.l.b16 %v551
          %v647 = vunpack.c.h.b16 %v551
          %v648 = vpack.c.b16 %v646, %v644
          %v649 = vpack.c.b16 %v647, %v645
          %v654 = vunpack.c.l.b16 %v564
          %v655 = vunpack.c.h.b16 %v564
          %v656 = vunpack.c.l.b16 %v565
          %v657 = vunpack.c.h.b16 %v565
          %v658 = vpack.c.b16 %v656, %v654
          %v659 = vpack.c.b16 %v657, %v655
          %v664 = vunpack.c.l.b16 %v578
          %v665 = vunpack.c.h.b16 %v578
          %v666 = vunpack.c.l.b16 %v579
          %v667 = vunpack.c.h.b16 %v579
          %v668 = vpack.c.b16 %v666, %v664
          %v669 = vpack.c.b16 %v667, %v665
          %v674 = vunpack.c.l.b16 %v592
          %v675 = vunpack.c.h.b16 %v592
          %v676 = vunpack.c.l.b16 %v593
          %v677 = vunpack.c.h.b16 %v593
          %v678 = vpack.c.b16 %v676, %v674
          %v679 = vpack.c.b16 %v677, %v675
          %v684 = vunpack.c.l.b16 %v606
          %v685 = vunpack.c.h.b16 %v606
          %v686 = vunpack.c.l.b16 %v607
          %v687 = vunpack.c.h.b16 %v607
          %v688 = vpack.c.b16 %v686, %v684
          %v689 = vpack.c.b16 %v687, %v685
          %v694 = vunpack.c.l.b16 %v620
          %v695 = vunpack.c.h.b16 %v620
          %v696 = vunpack.c.l.b16 %v621
          %v697 = vunpack.c.h.b16 %v621
          %v698 = vpack.c.b16 %v696, %v694
          %v699 = vpack.c.b16 %v697, %v695
          %702 = vmatpush.bf16.msra.mxu0 %v698
          %703 = vmatpush.bf16.msra.mxu0 %v688
          %704 = vmatpush.bf16.msra.mxu0 %v678
          %705 = vmatpush.bf16.msra.mxu0 %v668
          %706 = vmatpush.bf16.msra.mxu0 %v658
          %707 = vmatpush.bf16.msra.mxu0 %v648
          %708 = vmatpush.bf16.msra.mxu0 %v638
          %709 = vmatpush.bf16.msra.mxu0 %v628
          %710 = vmatmul.bf16.gmra.mxu0 %v509
          %v711 = vpop.f32.mrf.mxu0
          %v712 = vadd.f32 0.0, %v711
          %v713 = vpop.f32.mrf.mxu0
          %714 = vdwg.mxu0
          %715 = vmatpush.bf16.msra.mxu0 %v699
          %716 = vmatpush.bf16.msra.mxu0 %v689
          %717 = vmatpush.bf16.msra.mxu0 %v679
          %718 = vmatpush.bf16.msra.mxu0 %v669
          %719 = vmatpush.bf16.msra.mxu0 %v659
          %720 = vmatpush.bf16.msra.mxu0 %v649
          %721 = vmatpush.bf16.msra.mxu0 %v639
          %722 = vmatpush.bf16.msra.mxu0 %v629
          %723 = vmatmul.bf16.gmra.mxu0 %v509
          %v724 = vpop.f32.mrf.mxu0
          %v725 = vadd.f32 0.0, %v724
          %v726 = vpop.f32.mrf.mxu0
          %727 = vdwg.mxu0
          %v728 = vunpack.c.l.bf16 %v509
          %729 = vadd.xlane.f32.xlu0 %v728
          %v730 = vpop.xlane.xlu0 %729
          %s731 = smul.u32 %s45, 2
          %s732 = scalar_lea.vmem %s321, %s731 [#allocation10]
          %v733 = vld [vmem:[%s732] sm:$0x3]
          %v734 = vld [vmem:[%s358] sm:$0xff]
          %v735 = vld [vmem:[%s358 + $0x8] sm:$0xff]
          %v736 = vmul.f32 %v730, 8.0
          %v737 = vsub.f32 %v712, %v736
          %v738 = vsub.f32 %v725, %v736
          %v740 = vperm.slane %v733, 0
          %v741 = vperm.slane %v733, 1
          %v744 = vmul.f32 %v737, %v740
          %v745 = vmul.f32 %v738, %v741
          %v746 = vadd.f32 %v734, %v744
          %v747 = vadd.f32 %v735, %v745
          %748 = vst [vmem:[%s358] sm:$0xff] %v746
          %749 = vst [vmem:[%s358 + $0x8] sm:$0xff] %v747
        $region60: #{tpu_custom_call.1} parent=39 // pred_fallthru
          _
        %s750 = sand.u32 %s184, 1
        %s751 = scalar_lea.sflag [#allocation7], %s750
        %s752 = sand.u32 %s184, 1
        %s753 = smul.addr %s752, 16
        %s754 = scalar_lea.vmem [#allocation11], %s753
        // Predicated region
        $region61: #{tpu_custom_call.1} parent=39 // pred_check
          %p755 = pneg %p194
        $region62: #{tpu_custom_call.1} parent=39 // pred_check_branch
          %757 = sbr.rel (%p755) target = $region64
        $region63: #{tpu_custom_call.1} parent=39 // pred_region
          %s758 = smul.u32 2, %s44
          %760 = vsyncadd %s751, 0
          %s761 = smul.addr %s758, 8
          %s762 = scalar_lea.hbm %s7, %s761
          %s764 = sshll.u32 %s754, 4
          %s765 = int_to_ptr.vmem [resolvable:$true] %s764
          %s766 = sshll.u32 %s762, 4
          %s767 = int_to_ptr.hbm [resolvable:$true] %s766
          %769 = dma.vmem_to_hbm [thread:$0]  %s765, 256, %s767, %s751
        $region64: #{tpu_custom_call.1} parent=39 // pred_fallthru
          _
      $region40: #{tpu_custom_call.1} parent=5 // pred_fallthru
        _
      %p770 = scmp.le.s32.totalorder 2, %s35
      // Predicated region
      $region65: #{tpu_custom_call.1} parent=5 // pred_check
        %p771 = pneg %p770
      $region66: #{tpu_custom_call.1} parent=5 // pred_check_branch
        %773 = sbr.rel (%p771) target = $region68
      $region67: #{tpu_custom_call.1} parent=5 // pred_region
        %s774 = ssub.s32 %s35, 2
        // Predicated region
        $region69: #{tpu_custom_call.1} parent=67 // pred_check
          %p775 = pneg %p200
        $region70: #{tpu_custom_call.1} parent=67 // pred_check_branch
          %777 = sbr.rel (%p775) target = $region72
        $region71: #{tpu_custom_call.1} parent=67 // pred_region
          %s778 = sand.u32 %s185, 1
          %s779 = scalar_lea.sflag [#allocation7], %s778
          %s780 = sand.u32 %s185, 1
          %s781 = smul.addr %s780, 16
          %s782 = scalar_lea.vmem [#allocation11], %s781
          %784 = dma.done %s779, 256
        $region72: #{tpu_custom_call.1} parent=67 // pred_fallthru
          _
      $region68: #{tpu_custom_call.1} parent=5 // pred_fallthru
        _
    $region6: #{tpu_custom_call.1} parent=1 // loop_footer
      %s39 = sadd.s32 1, %s35
    $region7: #{tpu_custom_call.1} parent=1 // loop_footer_branch
      %34 = sbr.rel target = $region3
    $region8: #{tpu_custom_call.1} parent=1 // loop_exit
      _
    %785 = vsyncpa [#allocation6], 1
    %s786 = scalar_lea.sflag [#allocation6], 1
    %787 = vsyncpa %s786, 1
    %788 = vsyncpa [#allocation9], 1
    %s789 = scalar_lea.sflag [#allocation9], 1
    %790 = vsyncpa %s789, 1
    %791 = vsyncpa [#allocation7], 1
    %s792 = scalar_lea.sflag [#allocation7], 1
    %793 = vsyncpa %s792, 1

</llo_original>
